<compile_context>
chip_gen: v7x
topology: tpu7x:2x2x1
jax: 0.10.0
libtpu: 0.0.40
codegen_flags: <defaults>
</compile_context>

<pallas_src>
import jax
import jax.numpy as jnp
from jax.experimental import pallas as pl
from jax.experimental.pallas import tpu as pltpu

EMBED_DIM = 256
FF_DIM = 512


# ----------------------------------------------------------------------------
# Pallas kernel: one M-tile of  y = relu(x @ W1 + b1) @ W2 + b2
# ----------------------------------------------------------------------------
def ffn_kernel(x_ref, w1_ref, b1_ref, w2_ref, b2_ref, o_ref):
    x = x_ref[...]                                   # (tm, D) f32

    h = jnp.dot(x.astype(jnp.bfloat16), w1_ref[...],  # bf16 x bf16 -> f32 acc
                preferred_element_type=jnp.float32)
    h = jnp.maximum(h + b1_ref[...], 0.0)             # bias + ReLU in f32

    y = jnp.dot(h.astype(jnp.bfloat16), w2_ref[...],
                preferred_element_type=jnp.float32)
    o_ref[...] = y + b2_ref[...]


# ----------------------------------------------------------------------------
# Wrapper
# ----------------------------------------------------------------------------
def _round_up(n, m):
    return ((n + m - 1) // m) * m


def ffn_forward(x, w1, b1, w2, b2, *, block_m=256):
    """x: (B, S, D) f32.  w1: (D, FF), w2: (FF, D) pre-transposed.  Returns (B, S, D)."""
    B, S, D = x.shape
    FF = w1.shape[1]
    M = B * S

    x2 = x.reshape(M, D)
    tm = min(block_m, _round_up(M, 8))               # small inputs: one tile
    Mp = _round_up(M, tm)
    if Mp != M:
        x2 = jnp.pad(x2, ((0, Mp - M), (0, 0)))

    # Cast weights once on the host side -> bf16 MXU operands, half the traffic.
    w1b = w1.astype(jnp.bfloat16)
    w2b = w2.astype(jnp.bfloat16)

    out = pl.pallas_call(
        ffn_kernel,
        out_shape=jax.ShapeDtypeStruct((Mp, D), jnp.float32),
        grid=(Mp // tm,),
        in_specs=[
            pl.BlockSpec((tm, D), lambda i: (i, 0)),   # activation tile
            pl.BlockSpec((D, FF), lambda i: (0, 0)),   # W1 resident
            pl.BlockSpec((1, FF), lambda i: (0, 0)),   # b1 resident
            pl.BlockSpec((FF, D), lambda i: (0, 0)),   # W2 resident
            pl.BlockSpec((1, D), lambda i: (0, 0)),    # b2 resident
        ],
        out_specs=pl.BlockSpec((tm, D), lambda i: (i, 0)),
        compiler_params=pltpu.CompilerParams(
            dimension_semantics=("parallel",)),        # megacore on v7x
    )(x2, w1b, b1, w2b, b2)

    return out[:M].reshape(B, S, D)


# ----------------------------------------------------------------------------
# Deterministic parameter init (shapes from the PyTorch module)
# ----------------------------------------------------------------------------
def init_params(key):
    k1w, k1b, k2w, k2b = jax.random.split(key, 4)
    w1 = jax.random.normal(k1w, (EMBED_DIM, FF_DIM), jnp.float32) * 0.02
    b1 = jax.random.normal(k1b, (1, FF_DIM), jnp.float32) * 0.02
    w2 = jax.random.normal(k2w, (FF_DIM, EMBED_DIM), jnp.float32) * 0.02
    b2 = jax.random.normal(k2b, (1, EMBED_DIM), jnp.float32) * 0.02
    return w1, b1, w2, b2


# ----------------------------------------------------------------------------
# Pure-JAX f32 reference (mirrors the PyTorch forward) for verification
# ----------------------------------------------------------------------------
def reference_forward(x, w1, b1, w2, b2):
    h = jnp.maximum(x @ w1 + b1, 0.0)
    return h @ w2 + b2


# ----------------------------------------------------------------------------
if __name__ == "__main__":
    B, S = 2, 8
    key = jax.random.PRNGKey(0)
    k_x, k_p = jax.random.split(key)

    x = jax.random.normal(k_x, (B, S, EMBED_DIM), jnp.float32)
    w1, b1, w2, b2 = init_params(k_p)

    y = ffn_forward(x, w1, b1, w2, b2)
    y = jax.block_until_ready(y)

    assert y.shape == (B, S, EMBED_DIM)
    assert y.dtype == jnp.float32
    assert jnp.all(jnp.isfinite(y)), "non-finite output"

    ref = reference_forward(x, w1, b1, w2, b2)
    max_err = float(jnp.max(jnp.abs(y - ref)))
    scale = float(jnp.max(jnp.abs(ref))) + 1e-6
    # bf16 matmul operands with f32 accumulation -> small relative error.
    assert max_err < 5e-2 * scale, f"mismatch vs reference: {max_err} (scale {scale})"

    print("KERNEL_OK")
</pallas_src>

<mosaic_0001>
module attributes {stable_mosaic.version = 11 : i64} {
  func.func @ffn_kernel(%arg0: i32, %arg1: memref<16x256xf32, #tpu.memory_space<vmem>>, %arg2: memref<256x512xbf16, #tpu.memory_space<vmem>>, %arg3: memref<1x512xf32, #tpu.memory_space<vmem>>, %arg4: memref<512x256xbf16, #tpu.memory_space<vmem>>, %arg5: memref<1x256xf32, #tpu.memory_space<vmem>>, %arg6: memref<16x256xf32, #tpu.memory_space<vmem>>) attributes {dimension_semantics = [#tpu.dimension_semantics<parallel>], iteration_bounds = array<i64: 1>, scalar_prefetch = 0 : i64, scratch_operands = 0 : i64, tpu.core_type = #tpu.core_type<tc>, window_params = [{transform_indices = @transform_0, window_bounds = array<i64: 16, 256>}, {pipeline_mode = #tpu.pipeline_mode<synchronous>, transform_indices = @transform_1, window_bounds = array<i64: 256, 512>}, {pipeline_mode = #tpu.pipeline_mode<synchronous>, transform_indices = @transform_2, window_bounds = array<i64: 1, 512>}, {pipeline_mode = #tpu.pipeline_mode<synchronous>, transform_indices = @transform_3, window_bounds = array<i64: 512, 256>}, {pipeline_mode = #tpu.pipeline_mode<synchronous>, transform_indices = @transform_4, window_bounds = array<i64: 1, 256>}, {transform_indices = @transform_5, window_bounds = array<i64: 16, 256>}]} {
    %c0 = arith.constant 0 : index
    %c0_0 = arith.constant 0 : index
    %0 = vector.load %arg1[%c0, %c0_0] : memref<16x256xf32, #tpu.memory_space<vmem>>, vector<16x256xf32>
    %1 = arith.truncf %0 : vector<16x256xf32> to vector<16x256xbf16>
    %c0_1 = arith.constant 0 : index
    %c0_2 = arith.constant 0 : index
    %2 = vector.load %arg2[%c0_1, %c0_2] : memref<256x512xbf16, #tpu.memory_space<vmem>>, vector<256x512xbf16>
    %cst = arith.constant dense<0.000000e+00> : vector<16x512xf32>
    %3 = tpu.matmul %1, %2, %cst {dimension_numbers = #tpu.dot_dimension_numbers<[1], [0], [0], [1], [0, 0, 1, 1], [], []>} : vector<16x256xbf16>, vector<256x512xbf16>, vector<16x512xf32> -> vector<16x512xf32>
    %c0_3 = arith.constant 0 : index
    %c0_4 = arith.constant 0 : index
    %4 = vector.load %arg3[%c0_3, %c0_4] : memref<1x512xf32, #tpu.memory_space<vmem>>, vector<1x512xf32>
    %5 = vector.broadcast %4 : vector<1x512xf32> to vector<16x512xf32>
    %6 = arith.addf %3, %5 : vector<16x512xf32>
    %cst_5 = arith.constant 0.000000e+00 : f32
    %7 = vector.broadcast %cst_5 : f32 to vector<16x512xf32>
    %8 = arith.maximumf %6, %7 : vector<16x512xf32>
    %9 = arith.truncf %8 : vector<16x512xf32> to vector<16x512xbf16>
    %c0_6 = arith.constant 0 : index
    %c0_7 = arith.constant 0 : index
    %10 = vector.load %arg4[%c0_6, %c0_7] : memref<512x256xbf16, #tpu.memory_space<vmem>>, vector<512x256xbf16>
    %cst_8 = arith.constant dense<0.000000e+00> : vector<16x256xf32>
    %11 = tpu.matmul %9, %10, %cst_8 {dimension_numbers = #tpu.dot_dimension_numbers<[1], [0], [0], [1], [0, 0, 1, 1], [], []>} : vector<16x512xbf16>, vector<512x256xbf16>, vector<16x256xf32> -> vector<16x256xf32>
    %c0_9 = arith.constant 0 : index
    %c0_10 = arith.constant 0 : index
    %12 = vector.load %arg5[%c0_9, %c0_10] : memref<1x256xf32, #tpu.memory_space<vmem>>, vector<1x256xf32>
    %13 = vector.broadcast %12 : vector<1x256xf32> to vector<16x256xf32>
    %14 = arith.addf %11, %13 : vector<16x256xf32>
    %c0_11 = arith.constant 0 : index
    %c0_12 = arith.constant 0 : index
    %15 = vector.load %arg6[%c0_11, %c0_12] : memref<16x256xf32, #tpu.memory_space<vmem>>, vector<16x256xf32>
    tpu.vector_store %arg6[%c0_11, %c0_12], %14 {strides = array<i32>} : memref<16x256xf32, #tpu.memory_space<vmem>>, vector<16x256xf32>,
    return
  }
  func.func @transform_0(%arg0: i32) -> (i32, i32) {
    %c0_i32 = arith.constant 0 : i32
    %c0_i32_0 = arith.constant 0 : i32
    return %arg0, %c0_i32 : i32, i32
  }
  func.func @transform_1(%arg0: i32) -> (i32, i32) {
    %c0_i32 = arith.constant 0 : i32
    %c0_i32_0 = arith.constant 0 : i32
    %c0_i32_1 = arith.constant 0 : i32
    return %c0_i32, %c0_i32_0 : i32, i32
  }
  func.func @transform_2(%arg0: i32) -> (i32, i32) {
    %c0_i32 = arith.constant 0 : i32
    %c0_i32_0 = arith.constant 0 : i32
    %c0_i32_1 = arith.constant 0 : i32
    return %c0_i32, %c0_i32_0 : i32, i32
  }
  func.func @transform_3(%arg0: i32) -> (i32, i32) {
    %c0_i32 = arith.constant 0 : i32
    %c0_i32_0 = arith.constant 0 : i32
    %c0_i32_1 = arith.constant 0 : i32
    return %c0_i32, %c0_i32_0 : i32, i32
  }
  func.func @transform_4(%arg0: i32) -> (i32, i32) {
    %c0_i32 = arith.constant 0 : i32
    %c0_i32_0 = arith.constant 0 : i32
    %c0_i32_1 = arith.constant 0 : i32
    return %c0_i32, %c0_i32_0 : i32, i32
  }
  func.func @transform_5(%arg0: i32) -> (i32, i32) {
    %c0_i32 = arith.constant 0 : i32
    %c0_i32_0 = arith.constant 0 : i32
    return %arg0, %c0_i32 : i32, i32
  }
}

</mosaic_0001>

<llo_original>
// kernel: tpu_custom_call.1
$region0: #{tpu_custom_call.1}
  #allocation0 [shape = 'u32[]', space=smem, size = 0x4, offset = 0x4, fixed_abs, tag = 'smem constant byte address 0x4 - core index']
  #allocation1 [shape = 'u32[144,128]{1,0:T(1,128)}', space=vmem, size = 0x12000, scoped, tag = 'internal scratch']
  %s0 = inlined_call_operand.hbm [shape: f32[16,256], index: 0, kind: input, shape index: {}]
  %s1 = inlined_call_operand.hbm [shape: bf16[256,512], index: 1, kind: input, shape index: {}]
  %s2 = inlined_call_operand.vmem [shape: f32[1,512], index: 2, kind: input, shape index: {}]
  %s3 = inlined_call_operand.hbm [shape: bf16[512,256], index: 3, kind: input, shape index: {}]
  %s4 = inlined_call_operand.vmem [shape: f32[1,256], index: 4, kind: input, shape index: {}]
  %s5 = inlined_call_operand.hbm [shape: f32[16,256], index: 5, kind: output, shape index: {}]
  %s6 = sld [smem:[#allocation0]]
  $region42: #{tpu_custom_call.1} parent=0
    _
  %s8 = ssub.s32 1, %s6
  %s9 = scalar_select 0, %s8, %s6
  $region1: #{tpu_custom_call.1} parent=0
    #allocation2 [shape = 'u8[16384]{0}', space=vmem, size = 0x4000, scoped, tag = 'input window, operand 0, single buffered']
    #allocation3 [shape = 's32[1]{0}', space=sflag, size = 0x4, scoped, tag = 'scoped memory for tpu_custom_call.1']
    #allocation4 [shape = 's32[1]{0}', space=sflag, size = 0x4, scoped, tag = 'scoped memory for tpu_custom_call.1']
    #allocation5 [shape = 'u8[262144]{0}', space=vmem, size = 0x40000, scoped, tag = 'input window, operand 1, single buffered']
    #allocation6 [shape = 's32[1]{0}', space=sflag, size = 0x4, scoped, tag = 'scoped memory for tpu_custom_call.1']
    #allocation7 [shape = 'u8[262144]{0}', space=vmem, size = 0x40000, scoped, tag = 'input window, operand 3, single buffered']
    #allocation8 [shape = 'u8[16384]{0}', space=vmem, size = 0x4000, scoped, tag = 'output window, operand 0, single buffered']
    %10 = vsyncpa [#allocation3], 0
    %11 = vsyncpa [#allocation6], 0
    %12 = vsyncpa [#allocation4], 0
    // Predicated region
    $region2: #{tpu_custom_call.1} parent=1 // pred_check
      _
    $region3: #{tpu_custom_call.1} parent=1 // pred_check_branch
      %14 = sbr.rel (0) target = $region5
    $region4: #{tpu_custom_call.1} parent=1 // pred_region
      %s16 = ssub.s32 512, 512
      %17 = vsyncadd [#allocation3], %s16
      %s18 = sshll.u32 [#allocation2], 4
      %s19 = int_to_ptr.vmem [resolvable:$true] %s18
      %24 = dma.hbm_to_vmem [thread:$0]  %s0, 512, %s19, [#allocation3], 256, 256, 16
    $region5: #{tpu_custom_call.1} parent=1 // pred_fallthru
      _
    // Predicated region
    $region6: #{tpu_custom_call.1} parent=1 // pred_check
      _
    $region7: #{tpu_custom_call.1} parent=1 // pred_check_branch
      %26 = sbr.rel (0) target = $region9
    $region8: #{tpu_custom_call.1} parent=1 // pred_region
      %s28 = ssub.s32 8192, 8192
      %29 = vsyncadd [#allocation6], %s28
      %s30 = sshll.u32 [#allocation5], 4
      %s31 = int_to_ptr.vmem [resolvable:$true] %s30
      %36 = dma.hbm_to_vmem [thread:$0]  %s1, 8192, %s31, [#allocation6], 256, 256, 16
    $region9: #{tpu_custom_call.1} parent=1 // pred_fallthru
      _
    // Predicated region
    $region10: #{tpu_custom_call.1} parent=1 // pred_check
      _
    $region11: #{tpu_custom_call.1} parent=1 // pred_check_branch
      %38 = sbr.rel (0) target = $region13
    $region12: #{tpu_custom_call.1} parent=1 // pred_region
      _
    $region13: #{tpu_custom_call.1} parent=1 // pred_fallthru
      _
    // Predicated region
    $region14: #{tpu_custom_call.1} parent=1 // pred_check
      _
    $region15: #{tpu_custom_call.1} parent=1 // pred_check_branch
      %40 = sbr.rel (0) target = $region17
    $region16: #{tpu_custom_call.1} parent=1 // pred_region
      %s42 = ssub.s32 8192, 8192
      %43 = vsyncadd [#allocation6], %s42
      %s44 = sshll.u32 [#allocation7], 4
      %s45 = int_to_ptr.vmem [resolvable:$true] %s44
      %50 = dma.hbm_to_vmem [thread:$0]  %s3, 8192, %s45, [#allocation6], 128, 128, 8
    $region17: #{tpu_custom_call.1} parent=1 // pred_fallthru
      _
    // Predicated region
    $region18: #{tpu_custom_call.1} parent=1 // pred_check
      _
    $region19: #{tpu_custom_call.1} parent=1 // pred_check_branch
      %52 = sbr.rel (0) target = $region21
    $region20: #{tpu_custom_call.1} parent=1 // pred_region
      _
    $region21: #{tpu_custom_call.1} parent=1 // pred_fallthru
      _
    // Predicated region
    $region22: #{tpu_custom_call.1} parent=1 // pred_check
      _
    $region23: #{tpu_custom_call.1} parent=1 // pred_check_branch
      %54 = sbr.rel (0) target = $region25
    $region24: #{tpu_custom_call.1} parent=1 // pred_region
      %55 = dma.done [#allocation3], 512
    $region25: #{tpu_custom_call.1} parent=1 // pred_fallthru
      _
    // Predicated region
    $region26: #{tpu_custom_call.1} parent=1 // pred_check
      _
    $region27: #{tpu_custom_call.1} parent=1 // pred_check_branch
      %57 = sbr.rel (0) target = $region29
    $region28: #{tpu_custom_call.1} parent=1 // pred_region
      %58 = dma.done [#allocation6], 8192
    $region29: #{tpu_custom_call.1} parent=1 // pred_fallthru
      _
    // Predicated region
    $region30: #{tpu_custom_call.1} parent=1 // pred_check
      _
    $region31: #{tpu_custom_call.1} parent=1 // pred_check_branch
      %60 = sbr.rel (0) target = $region33
    $region32: #{tpu_custom_call.1} parent=1 // pred_region
      %61 = dma.done [#allocation6], 8192
    $region33: #{tpu_custom_call.1} parent=1 // pred_fallthru
      _
    %v62 = vld [vmem:[#allocation2] sm:$0xff]
    %v63 = vld [vmem:[#allocation2 + $0x8] sm:$0xff]
    %v64 = vld [vmem:[#allocation2 + $0x10] sm:$0xff]
    %v65 = vld [vmem:[#allocation2 + $0x18] sm:$0xff]
    %v66 = vpack.c.bf16 %v64, %v62
    %v67 = vpack.c.bf16 %v65, %v63
    %v68 = vld [vmem:[#allocation5] sm:$0xff]
    %v69 = vld [vmem:[#allocation5 + $0x8] sm:$0xff]
    %v70 = vld [vmem:[#allocation5 + $0x10] sm:$0xff]
    %v71 = vld [vmem:[#allocation5 + $0x18] sm:$0xff]
    %v72 = vld [vmem:[#allocation5 + $0x20] sm:$0xff]
    %v73 = vld [vmem:[#allocation5 + $0x28] sm:$0xff]
    %v74 = vld [vmem:[#allocation5 + $0x30] sm:$0xff]
    %v75 = vld [vmem:[#allocation5 + $0x38] sm:$0xff]
    %v76 = vld [vmem:[#allocation5 + $0x40] sm:$0xff]
    %v77 = vld [vmem:[#allocation5 + $0x48] sm:$0xff]
    %v78 = vld [vmem:[#allocation5 + $0x50] sm:$0xff]
    %v79 = vld [vmem:[#allocation5 + $0x58] sm:$0xff]
    %v80 = vld [vmem:[#allocation5 + $0x60] sm:$0xff]
    %v81 = vld [vmem:[#allocation5 + $0x68] sm:$0xff]
    %v82 = vld [vmem:[#allocation5 + $0x70] sm:$0xff]
    %v83 = vld [vmem:[#allocation5 + $0x78] sm:$0xff]
    %v84 = vld [vmem:[#allocation5 + $0x80] sm:$0xff]
    %v85 = vld [vmem:[#allocation5 + $0x88] sm:$0xff]
    %v86 = vld [vmem:[#allocation5 + $0x90] sm:$0xff]
    %v87 = vld [vmem:[#allocation5 + $0x98] sm:$0xff]
    %v88 = vld [vmem:[#allocation5 + $0xa0] sm:$0xff]
    %v89 = vld [vmem:[#allocation5 + $0xa8] sm:$0xff]
    %v90 = vld [vmem:[#allocation5 + $0xb0] sm:$0xff]
    %v91 = vld [vmem:[#allocation5 + $0xb8] sm:$0xff]
    %v92 = vld [vmem:[#allocation5 + $0xc0] sm:$0xff]
    %v93 = vld [vmem:[#allocation5 + $0xc8] sm:$0xff]
    %v94 = vld [vmem:[#allocation5 + $0xd0] sm:$0xff]
    %v95 = vld [vmem:[#allocation5 + $0xd8] sm:$0xff]
    %v96 = vld [vmem:[#allocation5 + $0xe0] sm:$0xff]
    %v97 = vld [vmem:[#allocation5 + $0xe8] sm:$0xff]
    %v98 = vld [vmem:[#allocation5 + $0xf0] sm:$0xff]
    %v99 = vld [vmem:[#allocation5 + $0xf8] sm:$0xff]
    %v100 = vld [vmem:[#allocation5 + $0x100] sm:$0xff]
    %v101 = vld [vmem:[#allocation5 + $0x108] sm:$0xff]
    %v102 = vld [vmem:[#allocation5 + $0x110] sm:$0xff]
    %v103 = vld [vmem:[#allocation5 + $0x118] sm:$0xff]
    %v104 = vld [vmem:[#allocation5 + $0x120] sm:$0xff]
    %v105 = vld [vmem:[#allocation5 + $0x128] sm:$0xff]
    %v106 = vld [vmem:[#allocation5 + $0x130] sm:$0xff]
    %v107 = vld [vmem:[#allocation5 + $0x138] sm:$0xff]
    %v108 = vld [vmem:[#allocation5 + $0x140] sm:$0xff]
    %v109 = vld [vmem:[#allocation5 + $0x148] sm:$0xff]
    %v110 = vld [vmem:[#allocation5 + $0x150] sm:$0xff]
    %v111 = vld [vmem:[#allocation5 + $0x158] sm:$0xff]
    %v112 = vld [vmem:[#allocation5 + $0x160] sm:$0xff]
    %v113 = vld [vmem:[#allocation5 + $0x168] sm:$0xff]
    %v114 = vld [vmem:[#allocation5 + $0x170] sm:$0xff]
    %v115 = vld [vmem:[#allocation5 + $0x178] sm:$0xff]
    %v116 = vld [vmem:[#allocation5 + $0x180] sm:$0xff]
    %v117 = vld [vmem:[#allocation5 + $0x188] sm:$0xff]
    %v118 = vld [vmem:[#allocation5 + $0x190] sm:$0xff]
    %v119 = vld [vmem:[#allocation5 + $0x198] sm:$0xff]
    %v120 = vld [vmem:[#allocation5 + $0x1a0] sm:$0xff]
    %v121 = vld [vmem:[#allocation5 + $0x1a8] sm:$0xff]
    %v122 = vld [vmem:[#allocation5 + $0x1b0] sm:$0xff]
    %v123 = vld [vmem:[#allocation5 + $0x1b8] sm:$0xff]
    %v124 = vld [vmem:[#allocation5 + $0x1c0] sm:$0xff]
    %v125 = vld [vmem:[#allocation5 + $0x1c8] sm:$0xff]
    %v126 = vld [vmem:[#allocation5 + $0x1d0] sm:$0xff]
    %v127 = vld [vmem:[#allocation5 + $0x1d8] sm:$0xff]
    %v128 = vld [vmem:[#allocation5 + $0x1e0] sm:$0xff]
    %v129 = vld [vmem:[#allocation5 + $0x1e8] sm:$0xff]
    %v130 = vld [vmem:[#allocation5 + $0x1f0] sm:$0xff]
    %v131 = vld [vmem:[#allocation5 + $0x1f8] sm:$0xff]
    %v132 = vld [vmem:[%s2] sm:$0xf]
    %v134 = vlaneseq
    %v135 = vshrl.u32 %v134, 7
    %v136 = vsub.s32 0, %v135
    %v137 = vrot.slane %v132, %v136
    %v138 = vlaneseq
    %v139 = vshrl.u32 %v138, 7
    %v140 = vsub.s32 1, %v139
    %v141 = vrot.slane %v132, %v140
    %v142 = vlaneseq
    %v143 = vshrl.u32 %v142, 7
    %v144 = vsub.s32 2, %v143
    %v145 = vrot.slane %v132, %v144
    %v146 = vlaneseq
    %v147 = vshrl.u32 %v146, 7
    %v148 = vsub.s32 3, %v147
    %v149 = vrot.slane %v132, %v148
    %v218 = vunpack.c.l.b16 %v68
    %v219 = vunpack.c.h.b16 %v68
    %v220 = vunpack.c.l.b16 %v69
    %v221 = vunpack.c.h.b16 %v69
    %v222 = vunpack.c.l.b16 %v70
    %v223 = vunpack.c.h.b16 %v70
    %v224 = vunpack.c.l.b16 %v71
    %v225 = vunpack.c.h.b16 %v71
    %v226 = vunpack.c.l.b16 %v72
    %v227 = vunpack.c.h.b16 %v72
    %v228 = vunpack.c.l.b16 %v73
    %v229 = vunpack.c.h.b16 %v73
    %v230 = vunpack.c.l.b16 %v74
    %v231 = vunpack.c.h.b16 %v74
    %v232 = vunpack.c.l.b16 %v75
    %v233 = vunpack.c.h.b16 %v75
    %v234 = vunpack.c.l.b16 %v76
    %v235 = vunpack.c.h.b16 %v76
    %v236 = vunpack.c.l.b16 %v77
    %v237 = vunpack.c.h.b16 %v77
    %v238 = vunpack.c.l.b16 %v78
    %v239 = vunpack.c.h.b16 %v78
    %v240 = vunpack.c.l.b16 %v79
    %v241 = vunpack.c.h.b16 %v79
    %v242 = vunpack.c.l.b16 %v80
    %v243 = vunpack.c.h.b16 %v80
    %v244 = vunpack.c.l.b16 %v81
    %v245 = vunpack.c.h.b16 %v81
    %v246 = vunpack.c.l.b16 %v82
    %v247 = vunpack.c.h.b16 %v82
    %v248 = vunpack.c.l.b16 %v83
    %v249 = vunpack.c.h.b16 %v83
    %v250 = vunpack.c.l.b16 %v84
    %v251 = vunpack.c.h.b16 %v84
    %v252 = vunpack.c.l.b16 %v85
    %v253 = vunpack.c.h.b16 %v85
    %v254 = vunpack.c.l.b16 %v86
    %v255 = vunpack.c.h.b16 %v86
    %v256 = vunpack.c.l.b16 %v87
    %v257 = vunpack.c.h.b16 %v87
    %v258 = vunpack.c.l.b16 %v88
    %v259 = vunpack.c.h.b16 %v88
    %v260 = vunpack.c.l.b16 %v89
    %v261 = vunpack.c.h.b16 %v89
    %v262 = vunpack.c.l.b16 %v90
    %v263 = vunpack.c.h.b16 %v90
    %v264 = vunpack.c.l.b16 %v91
    %v265 = vunpack.c.h.b16 %v91
    %v266 = vunpack.c.l.b16 %v92
    %v267 = vunpack.c.h.b16 %v92
    %v268 = vunpack.c.l.b16 %v93
    %v269 = vunpack.c.h.b16 %v93
    %v270 = vunpack.c.l.b16 %v94
    %v271 = vunpack.c.h.b16 %v94
    %v272 = vunpack.c.l.b16 %v95
    %v273 = vunpack.c.h.b16 %v95
    %v274 = vunpack.c.l.b16 %v96
    %v275 = vunpack.c.h.b16 %v96
    %v276 = vunpack.c.l.b16 %v97
    %v277 = vunpack.c.h.b16 %v97
    %v278 = vunpack.c.l.b16 %v98
    %v279 = vunpack.c.h.b16 %v98
    %v280 = vunpack.c.l.b16 %v99
    %v281 = vunpack.c.h.b16 %v99
    %v282 = vunpack.c.l.b16 %v100
    %v283 = vunpack.c.h.b16 %v100
    %v284 = vunpack.c.l.b16 %v101
    %v285 = vunpack.c.h.b16 %v101
    %v286 = vunpack.c.l.b16 %v102
    %v287 = vunpack.c.h.b16 %v102
    %v288 = vunpack.c.l.b16 %v103
    %v289 = vunpack.c.h.b16 %v103
    %v290 = vunpack.c.l.b16 %v104
    %v291 = vunpack.c.h.b16 %v104
    %v292 = vunpack.c.l.b16 %v105
    %v293 = vunpack.c.h.b16 %v105
    %v294 = vunpack.c.l.b16 %v106
    %v295 = vunpack.c.h.b16 %v106
    %v296 = vunpack.c.l.b16 %v107
    %v297 = vunpack.c.h.b16 %v107
    %v298 = vunpack.c.l.b16 %v108
    %v299 = vunpack.c.h.b16 %v108
    %v300 = vunpack.c.l.b16 %v109
    %v301 = vunpack.c.h.b16 %v109
    %v302 = vunpack.c.l.b16 %v110
    %v303 = vunpack.c.h.b16 %v110
    %v304 = vunpack.c.l.b16 %v111
    %v305 = vunpack.c.h.b16 %v111
    %v306 = vunpack.c.l.b16 %v112
    %v307 = vunpack.c.h.b16 %v112
    %v308 = vunpack.c.l.b16 %v113
    %v309 = vunpack.c.h.b16 %v113
    %v310 = vunpack.c.l.b16 %v114
    %v311 = vunpack.c.h.b16 %v114
    %v312 = vunpack.c.l.b16 %v115
    %v313 = vunpack.c.h.b16 %v115
    %v314 = vunpack.c.l.b16 %v116
    %v315 = vunpack.c.h.b16 %v116
    %v316 = vunpack.c.l.b16 %v117
    %v317 = vunpack.c.h.b16 %v117
    %v318 = vunpack.c.l.b16 %v118
    %v319 = vunpack.c.h.b16 %v118
    %v320 = vunpack.c.l.b16 %v119
    %v321 = vunpack.c.h.b16 %v119
    %v322 = vunpack.c.l.b16 %v120
    %v323 = vunpack.c.h.b16 %v120
    %v324 = vunpack.c.l.b16 %v121
    %v325 = vunpack.c.h.b16 %v121
    %v326 = vunpack.c.l.b16 %v122
    %v327 = vunpack.c.h.b16 %v122
    %v328 = vunpack.c.l.b16 %v123
    %v329 = vunpack.c.h.b16 %v123
    %v330 = vunpack.c.l.b16 %v124
    %v331 = vunpack.c.h.b16 %v124
    %v332 = vunpack.c.l.b16 %v125
    %v333 = vunpack.c.h.b16 %v125
    %v334 = vunpack.c.l.b16 %v126
    %v335 = vunpack.c.h.b16 %v126
    %v336 = vunpack.c.l.b16 %v127
    %v337 = vunpack.c.h.b16 %v127
    %v338 = vunpack.c.l.b16 %v128
    %v339 = vunpack.c.h.b16 %v128
    %v340 = vunpack.c.l.b16 %v129
    %v341 = vunpack.c.h.b16 %v129
    %v342 = vunpack.c.l.b16 %v130
    %v343 = vunpack.c.h.b16 %v130
    %v344 = vunpack.c.l.b16 %v131
    %v345 = vunpack.c.h.b16 %v131
    %v346 = vpack.c.b16 %v222, %v218
    %v347 = vpack.c.b16 %v223, %v219
    %v348 = vpack.c.b16 %v224, %v220
    %v349 = vpack.c.b16 %v225, %v221
    %v350 = vpack.c.b16 %v230, %v226
    %v351 = vpack.c.b16 %v231, %v227
    %v352 = vpack.c.b16 %v232, %v228
    %v353 = vpack.c.b16 %v233, %v229
    %v354 = vpack.c.b16 %v238, %v234
    %v355 = vpack.c.b16 %v239, %v235
    %v356 = vpack.c.b16 %v240, %v236
    %v357 = vpack.c.b16 %v241, %v237
    %v358 = vpack.c.b16 %v246, %v242
    %v359 = vpack.c.b16 %v247, %v243
    %v360 = vpack.c.b16 %v248, %v244
    %v361 = vpack.c.b16 %v249, %v245
    %v362 = vpack.c.b16 %v254, %v250
    %v363 = vpack.c.b16 %v255, %v251
    %v364 = vpack.c.b16 %v256, %v252
    %v365 = vpack.c.b16 %v257, %v253
    %v366 = vpack.c.b16 %v262, %v258
    %v367 = vpack.c.b16 %v263, %v259
    %v368 = vpack.c.b16 %v264, %v260
    %v369 = vpack.c.b16 %v265, %v261
    %v370 = vpack.c.b16 %v270, %v266
    %v371 = vpack.c.b16 %v271, %v267
    %v372 = vpack.c.b16 %v272, %v268
    %v373 = vpack.c.b16 %v273, %v269
    %v374 = vpack.c.b16 %v278, %v274
    %v375 = vpack.c.b16 %v279, %v275
    %v376 = vpack.c.b16 %v280, %v276
    %v377 = vpack.c.b16 %v281, %v277
    %v378 = vpack.c.b16 %v286, %v282
    %v379 = vpack.c.b16 %v287, %v283
    %v380 = vpack.c.b16 %v288, %v284
    %v381 = vpack.c.b16 %v289, %v285
    %v382 = vpack.c.b16 %v294, %v290
    %v383 = vpack.c.b16 %v295, %v291
    %v384 = vpack.c.b16 %v296, %v292
    %v385 = vpack.c.b16 %v297, %v293
    %v386 = vpack.c.b16 %v302, %v298
    %v387 = vpack.c.b16 %v303, %v299
    %v388 = vpack.c.b16 %v304, %v300
    %v389 = vpack.c.b16 %v305, %v301
    %v390 = vpack.c.b16 %v310, %v306
    %v391 = vpack.c.b16 %v311, %v307
    %v392 = vpack.c.b16 %v312, %v308
    %v393 = vpack.c.b16 %v313, %v309
    %v394 = vpack.c.b16 %v318, %v314
    %v395 = vpack.c.b16 %v319, %v315
    %v396 = vpack.c.b16 %v320, %v316
    %v397 = vpack.c.b16 %v321, %v317
    %v398 = vpack.c.b16 %v326, %v322
    %v399 = vpack.c.b16 %v327, %v323
    %v400 = vpack.c.b16 %v328, %v324
    %v401 = vpack.c.b16 %v329, %v325
    %v402 = vpack.c.b16 %v334, %v330
    %v403 = vpack.c.b16 %v335, %v331
    %v404 = vpack.c.b16 %v336, %v332
    %v405 = vpack.c.b16 %v337, %v333
    %v406 = vpack.c.b16 %v342, %v338
    %v407 = vpack.c.b16 %v343, %v339
    %v408 = vpack.c.b16 %v344, %v340
    %v409 = vpack.c.b16 %v345, %v341
    %474 = vmatprep.subr.bf16.mxu0 %v347
    %475 = vmatpush1.bf16.msra.mxu0 %v346
    %476 = vmatprep.subr.bf16.mxu0 %v351
    %477 = vmatpush1.bf16.msra.mxu0 %v350
    %478 = vmatprep.subr.bf16.mxu0 %v355
    %479 = vmatpush1.bf16.msra.mxu0 %v354
    %480 = vmatprep.subr.bf16.mxu0 %v359
    %481 = vmatpush1.bf16.msra.mxu0 %v358
    %482 = vmatprep.subr.bf16.mxu0 %v363
    %483 = vmatpush1.bf16.msra.mxu0 %v362
    %484 = vmatprep.subr.bf16.mxu0 %v367
    %485 = vmatpush1.bf16.msra.mxu0 %v366
    %486 = vmatprep.subr.bf16.mxu0 %v371
    %487 = vmatpush1.bf16.msra.mxu0 %v370
    %488 = vmatprep.subr.bf16.mxu0 %v375
    %489 = vmatpush1.bf16.msra.mxu0 %v374
    %490 = vmatprep.subr.bf16.mxu0 %v379
    %491 = vmatpush1.bf16.msra.mxu0 %v378
    %492 = vmatprep.subr.bf16.mxu0 %v383
    %493 = vmatpush1.bf16.msra.mxu0 %v382
    %494 = vmatprep.subr.bf16.mxu0 %v387
    %495 = vmatpush1.bf16.msra.mxu0 %v386
    %496 = vmatprep.subr.bf16.mxu0 %v391
    %497 = vmatpush1.bf16.msra.mxu0 %v390
    %498 = vmatprep.subr.bf16.mxu0 %v395
    %499 = vmatpush1.bf16.msra.mxu0 %v394
    %500 = vmatprep.subr.bf16.mxu0 %v399
    %501 = vmatpush1.bf16.msra.mxu0 %v398
    %502 = vmatprep.subr.bf16.mxu0 %v403
    %503 = vmatpush1.bf16.msra.mxu0 %v402
    %504 = vmatprep.subr.bf16.mxu0 %v407
    %505 = vmatpush1.bf16.msra.mxu0 %v406
    %506 = vmatprep.mubr.bf16.mxu0 %v67
    %507 = vmatmul.mubr.bf16.gmra.mrb[0].mxu0 %v66
    %v508 = vpop.f32.mrb[0].mxu0
    %v509 = vadd.f32 %v137, %v508
    %v510 = vpop.f32.mrb[0].mxu0
    %v511 = vadd.f32 %v141, %v510
    %v512 = vpop.f32.mrb[0].mxu0
    %v513 = vadd.f32 %v137, %v512
    %v514 = vpop.f32.mrb[0].mxu0
    %v515 = vadd.f32 %v141, %v514
    %516 = vdwg.mxu0
    %517 = vmatprep.subr.bf16.mxu0 %v349
    %518 = vmatpush1.bf16.msra.mxu0 %v348
    %519 = vmatprep.subr.bf16.mxu0 %v353
    %520 = vmatpush1.bf16.msra.mxu0 %v352
    %521 = vmatprep.subr.bf16.mxu0 %v357
    %522 = vmatpush1.bf16.msra.mxu0 %v356
    %523 = vmatprep.subr.bf16.mxu0 %v361
    %524 = vmatpush1.bf16.msra.mxu0 %v360
    %525 = vmatprep.subr.bf16.mxu0 %v365
    %526 = vmatpush1.bf16.msra.mxu0 %v364
    %527 = vmatprep.subr.bf16.mxu0 %v369
    %528 = vmatpush1.bf16.msra.mxu0 %v368
    %529 = vmatprep.subr.bf16.mxu0 %v373
    %530 = vmatpush1.bf16.msra.mxu0 %v372
    %531 = vmatprep.subr.bf16.mxu0 %v377
    %532 = vmatpush1.bf16.msra.mxu0 %v376
    %533 = vmatprep.subr.bf16.mxu0 %v381
    %534 = vmatpush1.bf16.msra.mxu0 %v380
    %535 = vmatprep.subr.bf16.mxu0 %v385
    %536 = vmatpush1.bf16.msra.mxu0 %v384
    %537 = vmatprep.subr.bf16.mxu0 %v389
    %538 = vmatpush1.bf16.msra.mxu0 %v388
    %539 = vmatprep.subr.bf16.mxu0 %v393
    %540 = vmatpush1.bf16.msra.mxu0 %v392
    %541 = vmatprep.subr.bf16.mxu0 %v397
    %542 = vmatpush1.bf16.msra.mxu0 %v396
    %543 = vmatprep.subr.bf16.mxu0 %v401
    %544 = vmatpush1.bf16.msra.mxu0 %v400
    %545 = vmatprep.subr.bf16.mxu0 %v405
    %546 = vmatpush1.bf16.msra.mxu0 %v404
    %547 = vmatprep.subr.bf16.mxu0 %v409
    %548 = vmatpush1.bf16.msra.mxu0 %v408
    %549 = vmatprep.mubr.bf16.mxu0 %v67
    %550 = vmatmul.mubr.bf16.gmra.mrb[0].mxu0 %v66
    %v551 = vpop.f32.mrb[0].mxu0
    %v552 = vadd.f32 %v145, %v551
    %v553 = vpop.f32.mrb[0].mxu0
    %v554 = vadd.f32 %v149, %v553
    %v555 = vpop.f32.mrb[0].mxu0
    %v556 = vadd.f32 %v145, %v555
    %v557 = vpop.f32.mrb[0].mxu0
    %v558 = vadd.f32 %v149, %v557
    %559 = vdwg.mxu0
    %v560 = vmax.f32 %v509, 0.0
    %v561 = vmax.f32 %v511, 0.0
    %v562 = vmax.f32 %v552, 0.0
    %v563 = vmax.f32 %v554, 0.0
    %v564 = vmax.f32 %v513, 0.0
    %v565 = vmax.f32 %v515, 0.0
    %v566 = vmax.f32 %v556, 0.0
    %v567 = vmax.f32 %v558, 0.0
    %v568 = vpack.c.bf16 %v564, %v560
    %v569 = vpack.c.bf16 %v565, %v561
    %v570 = vpack.c.bf16 %v566, %v562
    %v571 = vpack.c.bf16 %v567, %v563
    %v572 = vld [vmem:[#allocation7] sm:$0xff]
    %v573 = vld [vmem:[#allocation7 + $0x8] sm:$0xff]
    %v574 = vld [vmem:[#allocation7 + $0x10] sm:$0xff]
    %v575 = vld [vmem:[#allocation7 + $0x18] sm:$0xff]
    %v576 = vld [vmem:[#allocation7 + $0x20] sm:$0xff]
    %v577 = vld [vmem:[#allocation7 + $0x28] sm:$0xff]
    %v578 = vld [vmem:[#allocation7 + $0x30] sm:$0xff]
    %v579 = vld [vmem:[#allocation7 + $0x38] sm:$0xff]
    %v580 = vld [vmem:[#allocation7 + $0x40] sm:$0xff]
    %v581 = vld [vmem:[#allocation7 + $0x48] sm:$0xff]
    %v582 = vld [vmem:[#allocation7 + $0x50] sm:$0xff]
    %v583 = vld [vmem:[#allocation7 + $0x58] sm:$0xff]
    %v584 = vld [vmem:[#allocation7 + $0x60] sm:$0xff]
    %v585 = vld [vmem:[#allocation7 + $0x68] sm:$0xff]
    %v586 = vld [vmem:[#allocation7 + $0x70] sm:$0xff]
    %v587 = vld [vmem:[#allocation7 + $0x78] sm:$0xff]
    %v588 = vld [vmem:[#allocation7 + $0x80] sm:$0xff]
    %v589 = vld [vmem:[#allocation7 + $0x88] sm:$0xff]
    %v590 = vld [vmem:[#allocation7 + $0x90] sm:$0xff]
    %v591 = vld [vmem:[#allocation7 + $0x98] sm:$0xff]
    %v592 = vld [vmem:[#allocation7 + $0xa0] sm:$0xff]
    %v593 = vld [vmem:[#allocation7 + $0xa8] sm:$0xff]
    %v594 = vld [vmem:[#allocation7 + $0xb0] sm:$0xff]
    %v595 = vld [vmem:[#allocation7 + $0xb8] sm:$0xff]
    %v596 = vld [vmem:[#allocation7 + $0xc0] sm:$0xff]
    %v597 = vld [vmem:[#allocation7 + $0xc8] sm:$0xff]
    %v598 = vld [vmem:[#allocation7 + $0xd0] sm:$0xff]
    %v599 = vld [vmem:[#allocation7 + $0xd8] sm:$0xff]
    %v600 = vld [vmem:[#allocation7 + $0xe0] sm:$0xff]
    %v601 = vld [vmem:[#allocation7 + $0xe8] sm:$0xff]
    %v602 = vld [vmem:[#allocation7 + $0xf0] sm:$0xff]
    %v603 = vld [vmem:[#allocation7 + $0xf8] sm:$0xff]
    %v604 = vld [vmem:[#allocation7 + $0x100] sm:$0xff]
    %v605 = vld [vmem:[#allocation7 + $0x108] sm:$0xff]
    %v606 = vld [vmem:[#allocation7 + $0x110] sm:$0xff]
    %v607 = vld [vmem:[#allocation7 + $0x118] sm:$0xff]
    %v608 = vld [vmem:[#allocation7 + $0x120] sm:$0xff]
    %v609 = vld [vmem:[#allocation7 + $0x128] sm:$0xff]
    %v610 = vld [vmem:[#allocation7 + $0x130] sm:$0xff]
    %v611 = vld [vmem:[#allocation7 + $0x138] sm:$0xff]
    %v612 = vld [vmem:[#allocation7 + $0x140] sm:$0xff]
    %v613 = vld [vmem:[#allocation7 + $0x148] sm:$0xff]
    %v614 = vld [vmem:[#allocation7 + $0x150] sm:$0xff]
    %v615 = vld [vmem:[#allocation7 + $0x158] sm:$0xff]
    %v616 = vld [vmem:[#allocation7 + $0x160] sm:$0xff]
    %v617 = vld [vmem:[#allocation7 + $0x168] sm:$0xff]
    %v618 = vld [vmem:[#allocation7 + $0x170] sm:$0xff]
    %v619 = vld [vmem:[#allocation7 + $0x178] sm:$0xff]
    %v620 = vld [vmem:[#allocation7 + $0x180] sm:$0xff]
    %v621 = vld [vmem:[#allocation7 + $0x188] sm:$0xff]
    %v622 = vld [vmem:[#allocation7 + $0x190] sm:$0xff]
    %v623 = vld [vmem:[#allocation7 + $0x198] sm:$0xff]
    %v624 = vld [vmem:[#allocation7 + $0x1a0] sm:$0xff]
    %v625 = vld [vmem:[#allocation7 + $0x1a8] sm:$0xff]
    %v626 = vld [vmem:[#allocation7 + $0x1b0] sm:$0xff]
    %v627 = vld [vmem:[#allocation7 + $0x1b8] sm:$0xff]
    %v628 = vld [vmem:[#allocation7 + $0x1c0] sm:$0xff]
    %v629 = vld [vmem:[#allocation7 + $0x1c8] sm:$0xff]
    %v630 = vld [vmem:[#allocation7 + $0x1d0] sm:$0xff]
    %v631 = vld [vmem:[#allocation7 + $0x1d8] sm:$0xff]
    %v632 = vld [vmem:[#allocation7 + $0x1e0] sm:$0xff]
    %v633 = vld [vmem:[#allocation7 + $0x1e8] sm:$0xff]
    %v634 = vld [vmem:[#allocation7 + $0x1f0] sm:$0xff]
    %v635 = vld [vmem:[#allocation7 + $0x1f8] sm:$0xff]
    %v636 = vld [vmem:[%s4] sm:$0x3]
    %v638 = vlaneseq
    %v639 = vshrl.u32 %v638, 7
    %v640 = vsub.s32 0, %v639
    %v641 = vrot.slane %v636, %v640
    %v642 = vlaneseq
    %v643 = vshrl.u32 %v642, 7
    %v644 = vsub.s32 1, %v643
    %v645 = vrot.slane %v636, %v644
    %v712 = vunpack.c.l.b16 %v572
    %v713 = vunpack.c.h.b16 %v572
    %v714 = vunpack.c.l.b16 %v573
    %v715 = vunpack.c.h.b16 %v573
    %v716 = vunpack.c.l.b16 %v574
    %v717 = vunpack.c.h.b16 %v574
    %v718 = vunpack.c.l.b16 %v575
    %v719 = vunpack.c.h.b16 %v575
    %v720 = vunpack.c.l.b16 %v576
    %v721 = vunpack.c.h.b16 %v576
    %v722 = vunpack.c.l.b16 %v577
    %v723 = vunpack.c.h.b16 %v577
    %v724 = vunpack.c.l.b16 %v578
    %v725 = vunpack.c.h.b16 %v578
    %v726 = vunpack.c.l.b16 %v579
    %v727 = vunpack.c.h.b16 %v579
    %v728 = vunpack.c.l.b16 %v580
    %v729 = vunpack.c.h.b16 %v580
    %v730 = vunpack.c.l.b16 %v581
    %v731 = vunpack.c.h.b16 %v581
    %v732 = vunpack.c.l.b16 %v582
    %v733 = vunpack.c.h.b16 %v582
    %v734 = vunpack.c.l.b16 %v583
    %v735 = vunpack.c.h.b16 %v583
    %v736 = vunpack.c.l.b16 %v584
    %v737 = vunpack.c.h.b16 %v584
    %v738 = vunpack.c.l.b16 %v585
    %v739 = vunpack.c.h.b16 %v585
    %v740 = vunpack.c.l.b16 %v586
    %v741 = vunpack.c.h.b16 %v586
    %v742 = vunpack.c.l.b16 %v587
    %v743 = vunpack.c.h.b16 %v587
    %v744 = vunpack.c.l.b16 %v588
    %v745 = vunpack.c.h.b16 %v588
    %v746 = vunpack.c.l.b16 %v589
    %v747 = vunpack.c.h.b16 %v589
    %v748 = vunpack.c.l.b16 %v590
    %v749 = vunpack.c.h.b16 %v590
    %v750 = vunpack.c.l.b16 %v591
    %v751 = vunpack.c.h.b16 %v591
    %v752 = vunpack.c.l.b16 %v592
    %v753 = vunpack.c.h.b16 %v592
    %v754 = vunpack.c.l.b16 %v593
    %v755 = vunpack.c.h.b16 %v593
    %v756 = vunpack.c.l.b16 %v594
    %v757 = vunpack.c.h.b16 %v594
    %v758 = vunpack.c.l.b16 %v595
    %v759 = vunpack.c.h.b16 %v595
    %v760 = vunpack.c.l.b16 %v596
    %v761 = vunpack.c.h.b16 %v596
    %v762 = vunpack.c.l.b16 %v597
    %v763 = vunpack.c.h.b16 %v597
    %v764 = vunpack.c.l.b16 %v598
    %v765 = vunpack.c.h.b16 %v598
    %v766 = vunpack.c.l.b16 %v599
    %v767 = vunpack.c.h.b16 %v599
    %v768 = vunpack.c.l.b16 %v600
    %v769 = vunpack.c.h.b16 %v600
    %v770 = vunpack.c.l.b16 %v601
    %v771 = vunpack.c.h.b16 %v601
    %v772 = vunpack.c.l.b16 %v602
    %v773 = vunpack.c.h.b16 %v602
    %v774 = vunpack.c.l.b16 %v603
    %v775 = vunpack.c.h.b16 %v603
    %v776 = vunpack.c.l.b16 %v604
    %v777 = vunpack.c.h.b16 %v604
    %v778 = vunpack.c.l.b16 %v605
    %v779 = vunpack.c.h.b16 %v605
    %v780 = vunpack.c.l.b16 %v606
    %v781 = vunpack.c.h.b16 %v606
    %v782 = vunpack.c.l.b16 %v607
    %v783 = vunpack.c.h.b16 %v607
    %v784 = vunpack.c.l.b16 %v608
    %v785 = vunpack.c.h.b16 %v608
    %v786 = vunpack.c.l.b16 %v609
    %v787 = vunpack.c.h.b16 %v609
    %v788 = vunpack.c.l.b16 %v610
    %v789 = vunpack.c.h.b16 %v610
    %v790 = vunpack.c.l.b16 %v611
    %v791 = vunpack.c.h.b16 %v611
    %v792 = vunpack.c.l.b16 %v612
    %v793 = vunpack.c.h.b16 %v612
    %v794 = vunpack.c.l.b16 %v613
    %v795 = vunpack.c.h.b16 %v613
    %v796 = vunpack.c.l.b16 %v614
    %v797 = vunpack.c.h.b16 %v614
    %v798 = vunpack.c.l.b16 %v615
    %v799 = vunpack.c.h.b16 %v615
    %v800 = vunpack.c.l.b16 %v616
    %v801 = vunpack.c.h.b16 %v616
    %v802 = vunpack.c.l.b16 %v617
    %v803 = vunpack.c.h.b16 %v617
    %v804 = vunpack.c.l.b16 %v618
    %v805 = vunpack.c.h.b16 %v618
    %v806 = vunpack.c.l.b16 %v619
    %v807 = vunpack.c.h.b16 %v619
    %v808 = vunpack.c.l.b16 %v620
    %v809 = vunpack.c.h.b16 %v620
    %v810 = vunpack.c.l.b16 %v621
    %v811 = vunpack.c.h.b16 %v621
    %v812 = vunpack.c.l.b16 %v622
    %v813 = vunpack.c.h.b16 %v622
    %v814 = vunpack.c.l.b16 %v623
    %v815 = vunpack.c.h.b16 %v623
    %v816 = vunpack.c.l.b16 %v624
    %v817 = vunpack.c.h.b16 %v624
    %v818 = vunpack.c.l.b16 %v625
    %v819 = vunpack.c.h.b16 %v625
    %v820 = vunpack.c.l.b16 %v626
    %v821 = vunpack.c.h.b16 %v626
    %v822 = vunpack.c.l.b16 %v627
    %v823 = vunpack.c.h.b16 %v627
    %v824 = vunpack.c.l.b16 %v628
    %v825 = vunpack.c.h.b16 %v628
    %v826 = vunpack.c.l.b16 %v629
    %v827 = vunpack.c.h.b16 %v629
    %v828 = vunpack.c.l.b16 %v630
    %v829 = vunpack.c.h.b16 %v630
    %v830 = vunpack.c.l.b16 %v631
    %v831 = vunpack.c.h.b16 %v631
    %v832 = vunpack.c.l.b16 %v632
    %v833 = vunpack.c.h.b16 %v632
    %v834 = vunpack.c.l.b16 %v633
    %v835 = vunpack.c.h.b16 %v633
    %v836 = vunpack.c.l.b16 %v634
    %v837 = vunpack.c.h.b16 %v634
    %v838 = vunpack.c.l.b16 %v635
    %v839 = vunpack.c.h.b16 %v635
    %v840 = vpack.c.b16 %v714, %v712
    %v841 = vpack.c.b16 %v715, %v713
    %v842 = vpack.c.b16 %v718, %v716
    %v843 = vpack.c.b16 %v719, %v717
    %v844 = vpack.c.b16 %v722, %v720
    %v845 = vpack.c.b16 %v723, %v721
    %v846 = vpack.c.b16 %v726, %v724
    %v847 = vpack.c.b16 %v727, %v725
    %v848 = vpack.c.b16 %v730, %v728
    %v849 = vpack.c.b16 %v731, %v729
    %v850 = vpack.c.b16 %v734, %v732
    %v851 = vpack.c.b16 %v735, %v733
    %v852 = vpack.c.b16 %v738, %v736
    %v853 = vpack.c.b16 %v739, %v737
    %v854 = vpack.c.b16 %v742, %v740
    %v855 = vpack.c.b16 %v743, %v741
    %v856 = vpack.c.b16 %v746, %v744
    %v857 = vpack.c.b16 %v747, %v745
    %v858 = vpack.c.b16 %v750, %v748
    %v859 = vpack.c.b16 %v751, %v749
    %v860 = vpack.c.b16 %v754, %v752
    %v861 = vpack.c.b16 %v755, %v753
    %v862 = vpack.c.b16 %v758, %v756
    %v863 = vpack.c.b16 %v759, %v757
    %v864 = vpack.c.b16 %v762, %v760
    %v865 = vpack.c.b16 %v763, %v761
    %v866 = vpack.c.b16 %v766, %v764
    %v867 = vpack.c.b16 %v767, %v765
    %v868 = vpack.c.b16 %v770, %v768
    %v869 = vpack.c.b16 %v771, %v769
    %v870 = vpack.c.b16 %v774, %v772
    %v871 = vpack.c.b16 %v775, %v773
    %v872 = vpack.c.b16 %v778, %v776
    %v873 = vpack.c.b16 %v779, %v777
    %v874 = vpack.c.b16 %v782, %v780
    %v875 = vpack.c.b16 %v783, %v781
    %v876 = vpack.c.b16 %v786, %v784
    %v877 = vpack.c.b16 %v787, %v785
    %v878 = vpack.c.b16 %v790, %v788
    %v879 = vpack.c.b16 %v791, %v789
    %v880 = vpack.c.b16 %v794, %v792
    %v881 = vpack.c.b16 %v795, %v793
    %v882 = vpack.c.b16 %v798, %v796
    %v883 = vpack.c.b16 %v799, %v797
    %v884 = vpack.c.b16 %v802, %v800
    %v885 = vpack.c.b16 %v803, %v801
    %v886 = vpack.c.b16 %v806, %v804
    %v887 = vpack.c.b16 %v807, %v805
    %v888 = vpack.c.b16 %v810, %v808
    %v889 = vpack.c.b16 %v811, %v809
    %v890 = vpack.c.b16 %v814, %v812
    %v891 = vpack.c.b16 %v815, %v813
    %v892 = vpack.c.b16 %v818, %v816
    %v893 = vpack.c.b16 %v819, %v817
    %v894 = vpack.c.b16 %v822, %v820
    %v895 = vpack.c.b16 %v823, %v821
    %v896 = vpack.c.b16 %v826, %v824
    %v897 = vpack.c.b16 %v827, %v825
    %v898 = vpack.c.b16 %v830, %v828
    %v899 = vpack.c.b16 %v831, %v829
    %v900 = vpack.c.b16 %v834, %v832
    %v901 = vpack.c.b16 %v835, %v833
    %v902 = vpack.c.b16 %v838, %v836
    %v903 = vpack.c.b16 %v839, %v837
    %968 = vmatprep.subr.bf16.mxu0 %v841
    %969 = vmatpush1.bf16.msra.mxu0 %v840
    %970 = vmatprep.subr.bf16.mxu0 %v843
    %971 = vmatpush1.bf16.msra.mxu0 %v842
    %972 = vmatprep.subr.bf16.mxu0 %v845
    %973 = vmatpush1.bf16.msra.mxu0 %v844
    %974 = vmatprep.subr.bf16.mxu0 %v847
    %975 = vmatpush1.bf16.msra.mxu0 %v846
    %976 = vmatprep.subr.bf16.mxu0 %v849
    %977 = vmatpush1.bf16.msra.mxu0 %v848
    %978 = vmatprep.subr.bf16.mxu0 %v851
    %979 = vmatpush1.bf16.msra.mxu0 %v850
    %980 = vmatprep.subr.bf16.mxu0 %v853
    %981 = vmatpush1.bf16.msra.mxu0 %v852
    %982 = vmatprep.subr.bf16.mxu0 %v855
    %983 = vmatpush1.bf16.msra.mxu0 %v854
    %984 = vmatprep.subr.bf16.mxu0 %v857
    %985 = vmatpush1.bf16.msra.mxu0 %v856
    %986 = vmatprep.subr.bf16.mxu0 %v859
    %987 = vmatpush1.bf16.msra.mxu0 %v858
    %988 = vmatprep.subr.bf16.mxu0 %v861
    %989 = vmatpush1.bf16.msra.mxu0 %v860
    %990 = vmatprep.subr.bf16.mxu0 %v863
    %991 = vmatpush1.bf16.msra.mxu0 %v862
    %992 = vmatprep.subr.bf16.mxu0 %v865
    %993 = vmatpush1.bf16.msra.mxu0 %v864
    %994 = vmatprep.subr.bf16.mxu0 %v867
    %995 = vmatpush1.bf16.msra.mxu0 %v866
    %996 = vmatprep.subr.bf16.mxu0 %v869
    %997 = vmatpush1.bf16.msra.mxu0 %v868
    %998 = vmatprep.subr.bf16.mxu0 %v871
    %999 = vmatpush1.bf16.msra.mxu0 %v870
    %1000 = vmatprep.mubr.bf16.mxu0 %v569
    %1001 = vmatmul.mubr.bf16.gmra.mrb[0].mxu0 %v568
    %v1002 = vpop.f32.mrb[0].mxu0
    %v1003 = vadd.f32 %v641, %v1002
    %v1004 = vpop.f32.mrb[0].mxu0
    %v1005 = vadd.f32 %v645, %v1004
    %v1006 = vpop.f32.mrb[0].mxu0
    %v1007 = vadd.f32 %v641, %v1006
    %v1008 = vpop.f32.mrb[0].mxu0
    %v1009 = vadd.f32 %v645, %v1008
    %1010 = vdwg.mxu0
    %1011 = vmatprep.subr.bf16.mxu0 %v873
    %1012 = vmatpush1.bf16.msra.mxu0 %v872
    %1013 = vmatprep.subr.bf16.mxu0 %v875
    %1014 = vmatpush1.bf16.msra.mxu0 %v874
    %1015 = vmatprep.subr.bf16.mxu0 %v877
    %1016 = vmatpush1.bf16.msra.mxu0 %v876
    %1017 = vmatprep.subr.bf16.mxu0 %v879
    %1018 = vmatpush1.bf16.msra.mxu0 %v878
    %1019 = vmatprep.subr.bf16.mxu0 %v881
    %1020 = vmatpush1.bf16.msra.mxu0 %v880
    %1021 = vmatprep.subr.bf16.mxu0 %v883
    %1022 = vmatpush1.bf16.msra.mxu0 %v882
    %1023 = vmatprep.subr.bf16.mxu0 %v885
    %1024 = vmatpush1.bf16.msra.mxu0 %v884
    %1025 = vmatprep.subr.bf16.mxu0 %v887
    %1026 = vmatpush1.bf16.msra.mxu0 %v886
    %1027 = vmatprep.subr.bf16.mxu0 %v889
    %1028 = vmatpush1.bf16.msra.mxu0 %v888
    %1029 = vmatprep.subr.bf16.mxu0 %v891
    %1030 = vmatpush1.bf16.msra.mxu0 %v890
    %1031 = vmatprep.subr.bf16.mxu0 %v893
    %1032 = vmatpush1.bf16.msra.mxu0 %v892
    %1033 = vmatprep.subr.bf16.mxu0 %v895
    %1034 = vmatpush1.bf16.msra.mxu0 %v894
    %1035 = vmatprep.subr.bf16.mxu0 %v897
    %1036 = vmatpush1.bf16.msra.mxu0 %v896
    %1037 = vmatprep.subr.bf16.mxu0 %v899
    %1038 = vmatpush1.bf16.msra.mxu0 %v898
    %1039 = vmatprep.subr.bf16.mxu0 %v901
    %1040 = vmatpush1.bf16.msra.mxu0 %v900
    %1041 = vmatprep.subr.bf16.mxu0 %v903
    %1042 = vmatpush1.bf16.msra.mxu0 %v902
    %1043 = vmatprep.mubr.bf16.mxu0 %v571
    %1044 = vmatmul.mubr.bf16.gmra.mrb[0].mxu0 %v570
    %v1045 = vpop.f32.mrb[0].mxu0
    %v1046 = vadd.f32 %v1003, %v1045
    %v1047 = vpop.f32.mrb[0].mxu0
    %v1048 = vadd.f32 %v1005, %v1047
    %v1049 = vpop.f32.mrb[0].mxu0
    %v1050 = vadd.f32 %v1007, %v1049
    %v1051 = vpop.f32.mrb[0].mxu0
    %v1052 = vadd.f32 %v1009, %v1051
    %1053 = vdwg.mxu0
    %1054 = vst [vmem:[#allocation8] sm:$0xff] %v1046
    %1055 = vst [vmem:[#allocation8 + $0x8] sm:$0xff] %v1048
    %1056 = vst [vmem:[#allocation8 + $0x10] sm:$0xff] %v1050
    %1057 = vst [vmem:[#allocation8 + $0x18] sm:$0xff] %v1052
    // Predicated region
    $region34: #{tpu_custom_call.1} parent=1 // pred_check
      _
    $region35: #{tpu_custom_call.1} parent=1 // pred_check_branch
      %1059 = sbr.rel (0) target = $region37
    $region36: #{tpu_custom_call.1} parent=1 // pred_region
      %s1061 = ssub.s32 512, 512
      %1062 = vsyncadd [#allocation4], %s1061
      %s1063 = sshll.u32 [#allocation8], 4
      %s1064 = int_to_ptr.vmem [resolvable:$true] %s1063
      %1069 = dma.vmem_to_hbm [thread:$0]  %s1064, 512, %s5, [#allocation4], 256, 256, 16
    $region37: #{tpu_custom_call.1} parent=1 // pred_fallthru
      _
    // Predicated region
    $region38: #{tpu_custom_call.1} parent=1 // pred_check
      _
    $region39: #{tpu_custom_call.1} parent=1 // pred_check_branch
      %1071 = sbr.rel (0) target = $region41
    $region40: #{tpu_custom_call.1} parent=1 // pred_region
      %1072 = dma.done [#allocation4], 512
    $region41: #{tpu_custom_call.1} parent=1 // pred_fallthru
      _
    %1073 = vsyncpa [#allocation3], 1
    %1074 = vsyncpa [#allocation6], 1
    %1075 = vsyncpa [#allocation4], 1

</llo_original>
